<compile_context>
chip_gen: v5e
topology: v5e:2x2
jax: 0.10.0
libtpu: 0.0.40
codegen_flags: <defaults>
</compile_context>

<pallas_src>
import functools

import jax
import jax.numpy as jnp
from jax.experimental import pallas as pl
from jax.experimental.pallas import tpu as pltpu


def _se_kernel(x_ref, w1t_ref, b1_ref, w2t_ref, b2_ref, o_ref, *, inv_hw):
    # x_ref / o_ref: [Nb, C, HW]  (Nb batch elements per grid step).
    #
    # x_ref is read twice (pooled sum + final scaled store) instead of keeping
    # one long-lived vreg copy across the pooling, both matmuls and the
    # broadcast; VMEM re-reads are effectively free (3 vld slots/cycle).

    # --- squeeze: AdaptiveAvgPool2d(1) == mean over H*W per channel.
    # The reduce runs over exactly HW lanes (ragged tail masked by Mosaic),
    # so sum * (1 / HW) is the exact mean. inv_hw is a Python constant and
    # the cross-lane sum stays on the XLU slot. Accumulate in f32.
    pooled = jnp.sum(x_ref[...].astype(jnp.float32), axis=-1) * inv_hw   # [Nb, C]

    # --- excite: 1x1 conv (C -> C/r); BN scale pre-folded into w1t ---
    z1 = jnp.dot(pooled, w1t_ref[...],
                 preferred_element_type=jnp.float32)                     # [Nb, Cr]
    h = jnp.maximum(z1 + b1_ref[...], 0.0)                               # ReLU

    # --- 1x1 conv (C/r -> C); BN scale pre-folded into w2t; hsigmoid ---
    z2 = jnp.dot(h, w2t_ref[...],
                 preferred_element_type=jnp.float32)                     # [Nb, C]
    a = z2 + b2_ref[...]
    y = jnp.clip(a + 3.0, 0.0, 6.0) * (1.0 / 6.0)                        # relu6(a+3)/6

    # --- scale: x * se(x), per-channel broadcast over spatial ---
    # Broadcast of y stays fused (sublane broadcast into the multiply); no
    # block-sized temporary is materialized.
    o_ref[...] = x_ref[...] * y.astype(o_ref.dtype)[:, :, None]


def _tpu_tuning():
    """Per-generation (target block bytes, vmem_limit cap, min grid steps)."""
    try:
        kind = jax.devices()[0].device_kind.lower()
    except Exception:
        kind = ""
    if "v7" in kind:
        # ~3.2 TB/s HBM, 64 MiB VMEM, 2 TCs sharing the grid: bigger blocks to
        # amortize the ~0.35us/step cost, and >=4 steps so each core keeps its
        # i+1 prefetch / i-1 writeback overlap.
        return 4 << 20, 40 << 20, 4
    if "v5 lite" in kind or "v5e" in kind:
        # ~0.8 TB/s HBM: 1-2 MiB blocks already make per-step overhead <10%;
        # keep the scoped-VMEM request modest.
        return 2 << 20, 24 << 20, 2
    # v6e / unknown.
    return 2 << 20, 40 << 20, 2


def _choose_block_batch(n, per_sample_bytes, target_bytes, min_steps):
    """How many batch elements per block: as large as the target allows while
    keeping at least `min_steps` grid steps when possible."""
    cap = max(1, target_bytes // max(1, per_sample_bytes))
    divisors = [d for d in range(1, n + 1) if n % d == 0 and d <= cap]
    for steps in (min_steps, 2):
        cand = [d for d in divisors if n // d >= steps]
        if cand:
            return max(cand)
    return max(divisors)


def se_module(x, w1, w2, bn1_params, bn2_params, eps=1e-5):
    """x: [N, C, H, W] (f32 or bf16). w1: [Cr, C], w2: [C, Cr] 1x1-conv kernels.

    bn*_params = (gamma, beta, running_mean, running_var); eval-mode BN.
    """
    N, C, H, W = x.shape
    Cr = w1.shape[0]
    HW = H * W
    itemsize = jnp.dtype(x.dtype).itemsize

    # Fold BatchNorm (eval mode) into per-channel scale/bias; then fold the
    # scales into the transposed weights so the kernel only needs the biases.
    def fold(p):
        gamma, beta, mean, var = p
        scale = gamma / jnp.sqrt(var + eps)
        bias = beta - mean * scale
        return scale, bias

    s1, b1 = fold(bn1_params)                               # [Cr]
    s2, b2 = fold(bn2_params)                               # [C]
    w1t = (w1.T * s1[None, :]).astype(jnp.float32)          # [C, Cr]
    w2t = (w2.T * s2[None, :]).astype(jnp.float32)          # [Cr, C]
    b1 = b1.reshape(1, Cr).astype(jnp.float32)
    b2 = b2.reshape(1, C).astype(jnp.float32)

    # No host-side pad/crop: the block's last dim equals the full HW axis
    # (legal even when not a multiple of 128); Mosaic masks the tail store.
    x_flat = x.reshape(N, C, HW)

    target_bytes, vmem_cap, min_steps = _tpu_tuning()
    per_sample = C * HW * itemsize
    Nb = _choose_block_batch(N, per_sample, target_bytes, min_steps)
    grid = (N // Nb,)

    # VMEM budget: (x in + out) x double-buffer x block, plus weights/slack.
    block_bytes = Nb * per_sample
    vmem_limit = int(min(vmem_cap, max(16 << 20, 4 * block_bytes + (4 << 20))))

    flops = 2 * N * (C * Cr + Cr * C)
    bytes_accessed = (2 * N * C * HW * itemsize
                      + (w1t.size + w2t.size + b1.size + b2.size) * 4)

    kernel = functools.partial(_se_kernel, inv_hw=1.0 / HW)

    out_flat = pl.pallas_call(
        kernel,
        out_shape=jax.ShapeDtypeStruct((N, C, HW), x.dtype),
        grid_spec=pltpu.PrefetchScalarGridSpec(
            num_scalar_prefetch=0,
            grid=grid,
            in_specs=[
                pl.BlockSpec((Nb, C, HW), lambda n: (n, 0, 0)),  # x
                pl.BlockSpec((C, Cr), lambda n: (0, 0)),         # w1^T * bn1.scale
                pl.BlockSpec((1, Cr), lambda n: (0, 0)),         # bn1 bias
                pl.BlockSpec((Cr, C), lambda n: (0, 0)),         # w2^T * bn2.scale
                pl.BlockSpec((1, C), lambda n: (0, 0)),          # bn2 bias
            ],
            out_specs=pl.BlockSpec((Nb, C, HW), lambda n: (n, 0, 0)),
        ),
        compiler_params=pltpu.CompilerParams(
            dimension_semantics=("parallel",),
            vmem_limit_bytes=vmem_limit),
        cost_estimate=pl.CostEstimate(
            flops=flops, transcendentals=0, bytes_accessed=bytes_accessed),
    )(x_flat, w1t, b1, w2t, b2)

    return out_flat.reshape(N, C, H, W)


def se_module_ref(x, w1, w2, bn1_params, bn2_params, eps=1e-5):
    """Pure-JAX reference (eval-mode BN), computed in f32."""
    g1, be1, m1, v1 = bn1_params
    g2, be2, m2, v2 = bn2_params
    xf = x.astype(jnp.float32)
    pooled = jnp.mean(xf, axis=(2, 3))                        # [N, C]
    z1 = pooled @ w1.T                                        # [N, Cr]
    z1 = (z1 - m1) / jnp.sqrt(v1 + eps) * g1 + be1
    h = jnp.maximum(z1, 0.0)
    z2 = h @ w2.T                                             # [N, C]
    z2 = (z2 - m2) / jnp.sqrt(v2 + eps) * g2 + be2
    y = jnp.clip(z2 + 3.0, 0.0, 6.0) / 6.0
    return xf * y[:, :, None, None]


def _make_params(key, C, Cr):
    kw1, kw2, kg1, kb1, km1, kv1, kg2, kb2, km2, kv2 = jax.random.split(key, 10)
    w1 = jax.random.normal(kw1, (Cr, C), dtype=jnp.float32) * 0.1
    w2 = jax.random.normal(kw2, (C, Cr), dtype=jnp.float32) * 0.1
    bn1 = (1.0 + 0.1 * jax.random.normal(kg1, (Cr,), dtype=jnp.float32),
           0.1 * jax.random.normal(kb1, (Cr,), dtype=jnp.float32),
           0.05 * jax.random.normal(km1, (Cr,), dtype=jnp.float32),
           jnp.abs(1.0 + 0.1 * jax.random.normal(kv1, (Cr,), dtype=jnp.float32)))
    bn2 = (1.0 + 0.1 * jax.random.normal(kg2, (C,), dtype=jnp.float32),
           0.1 * jax.random.normal(kb2, (C,), dtype=jnp.float32),
           0.05 * jax.random.normal(km2, (C,), dtype=jnp.float32),
           jnp.abs(1.0 + 0.1 * jax.random.normal(kv2, (C,), dtype=jnp.float32)))
    return w1, w2, bn1, bn2


if __name__ == "__main__":
    N, C, reduction = 2, 16, 4
    Cr = C // reduction

    key = jax.random.PRNGKey(0)
    kx1, kx2, kp = jax.random.split(key, 3)
    w1, w2, bn1, bn2 = _make_params(kp, C, Cr)

    # 1) f32, HW a multiple of 128 (16x16 = 256).
    x = jax.random.normal(kx1, (N, C, 16, 16), dtype=jnp.float32)
    out = jax.block_until_ready(se_module(x, w1, w2, bn1, bn2))
    ref = se_module_ref(x, w1, w2, bn1, bn2)
    assert out.shape == x.shape
    assert jnp.allclose(out, ref, atol=1e-5, rtol=1e-5), "f32 mismatch vs reference"

    # 2) f32, ragged spatial tail (10x10 = 100, not a multiple of 128):
    #    handled in-kernel (masked tail store), no host pad/crop.
    x_r = jax.random.normal(kx2, (N, C, 10, 10), dtype=jnp.float32)
    out_r = jax.block_until_ready(se_module(x_r, w1, w2, bn1, bn2))
    ref_r = se_module_ref(x_r, w1, w2, bn1, bn2)
    assert out_r.shape == x_r.shape
    assert jnp.allclose(out_r, ref_r, atol=1e-5, rtol=1e-5), "ragged-HW mismatch"

    # 3) bf16 I/O path (f32 accumulation inside the kernel).
    x_bf = x.astype(jnp.bfloat16)
    out_bf = jax.block_until_ready(se_module(x_bf, w1, w2, bn1, bn2))
    ref_bf = se_module_ref(x_bf, w1, w2, bn1, bn2)   # f32 ref from bf16 input
    assert out_bf.dtype == jnp.bfloat16 and out_bf.shape == x.shape
    max_err = float(jnp.max(jnp.abs(out_bf.astype(jnp.float32) - ref_bf)))
    assert max_err < 5e-2, f"bf16 mismatch vs reference (max err {max_err})"

    print("KERNEL_OK")
</pallas_src>

<mosaic_0001>
module attributes {stable_mosaic.version = 11 : i64} {
  func.func @_se_kernel(%arg0: i32, %arg1: memref<1x16x256xf32, #tpu.memory_space<vmem>>, %arg2: memref<16x4xf32, #tpu.memory_space<vmem>>, %arg3: memref<1x4xf32, #tpu.memory_space<vmem>>, %arg4: memref<4x16xf32, #tpu.memory_space<vmem>>, %arg5: memref<1x16xf32, #tpu.memory_space<vmem>>, %arg6: memref<1x16x256xf32, #tpu.memory_space<vmem>>) attributes {dimension_semantics = [#tpu.dimension_semantics<parallel>], iteration_bounds = array<i64: 2>, scalar_prefetch = 0 : i64, scratch_operands = 0 : i64, tpu.core_type = #tpu.core_type<tc>, window_params = [{transform_indices = @transform_0, window_bounds = array<i64: 1, 16, 256>}, {pipeline_mode = #tpu.pipeline_mode<synchronous>, transform_indices = @transform_1, window_bounds = array<i64: 16, 4>}, {pipeline_mode = #tpu.pipeline_mode<synchronous>, transform_indices = @transform_2, window_bounds = array<i64: 1, 4>}, {pipeline_mode = #tpu.pipeline_mode<synchronous>, transform_indices = @transform_3, window_bounds = array<i64: 4, 16>}, {pipeline_mode = #tpu.pipeline_mode<synchronous>, transform_indices = @transform_4, window_bounds = array<i64: 1, 16>}, {transform_indices = @transform_5, window_bounds = array<i64: 1, 16, 256>}]} {
    %c0 = arith.constant 0 : index
    %c0_0 = arith.constant 0 : index
    %c0_1 = arith.constant 0 : index
    %0 = vector.load %arg1[%c0, %c0_0, %c0_1] : memref<1x16x256xf32, #tpu.memory_space<vmem>>, vector<1x16x256xf32>
    %cst = arith.constant dense<0.000000e+00> : vector<1x16xf32>
    %1 = vector.multi_reduction <add>, %0, %cst [2] : vector<1x16x256xf32> to vector<1x16xf32>
    %cst_2 = arith.constant 3.906250e-03 : f32
    %2 = vector.broadcast %cst_2 : f32 to vector<1x16xf32>
    %3 = arith.mulf %1, %2 : vector<1x16xf32>
    %c0_3 = arith.constant 0 : index
    %c0_4 = arith.constant 0 : index
    %4 = vector.load %arg2[%c0_3, %c0_4] : memref<16x4xf32, #tpu.memory_space<vmem>>, vector<16x4xf32>
    %cst_5 = arith.constant dense<0.000000e+00> : vector<1x4xf32>
    %5 = tpu.matmul %3, %4, %cst_5 {dimension_numbers = #tpu.dot_dimension_numbers<[1], [0], [0], [1], [0, 0, 1, 1], [], []>} : vector<1x16xf32>, vector<16x4xf32>, vector<1x4xf32> -> vector<1x4xf32>
    %c0_6 = arith.constant 0 : index
    %c0_7 = arith.constant 0 : index
    %6 = vector.load %arg3[%c0_6, %c0_7] : memref<1x4xf32, #tpu.memory_space<vmem>>, vector<1x4xf32>
    %7 = arith.addf %5, %6 : vector<1x4xf32>
    %cst_8 = arith.constant 0.000000e+00 : f32
    %8 = vector.broadcast %cst_8 : f32 to vector<1x4xf32>
    %9 = arith.maximumf %7, %8 : vector<1x4xf32>
    %c0_9 = arith.constant 0 : index
    %c0_10 = arith.constant 0 : index
    %10 = vector.load %arg4[%c0_9, %c0_10] : memref<4x16xf32, #tpu.memory_space<vmem>>, vector<4x16xf32>
    %cst_11 = arith.constant dense<0.000000e+00> : vector<1x16xf32>
    %11 = tpu.matmul %9, %10, %cst_11 {dimension_numbers = #tpu.dot_dimension_numbers<[1], [0], [0], [1], [0, 0, 1, 1], [], []>} : vector<1x4xf32>, vector<4x16xf32>, vector<1x16xf32> -> vector<1x16xf32>
    %c0_12 = arith.constant 0 : index
    %c0_13 = arith.constant 0 : index
    %12 = vector.load %arg5[%c0_12, %c0_13] : memref<1x16xf32, #tpu.memory_space<vmem>>, vector<1x16xf32>
    %13 = arith.addf %11, %12 : vector<1x16xf32>
    %cst_14 = arith.constant 3.000000e+00 : f32
    %14 = vector.broadcast %cst_14 : f32 to vector<1x16xf32>
    %15 = arith.addf %13, %14 : vector<1x16xf32>
    %cst_15 = arith.constant 0.000000e+00 : f32
    %cst_16 = arith.constant 6.000000e+00 : f32
    %16 = vector.broadcast %cst_15 : f32 to vector<1x16xf32>
    %17 = arith.maximumf %16, %15 : vector<1x16xf32>
    %18 = vector.broadcast %cst_16 : f32 to vector<1x16xf32>
    %19 = arith.minimumf %18, %17 : vector<1x16xf32>
    %cst_17 = arith.constant 0.166666672 : f32
    %20 = vector.broadcast %cst_17 : f32 to vector<1x16xf32>
    %21 = arith.mulf %19, %20 : vector<1x16xf32>
    %c0_18 = arith.constant 0 : index
    %c0_19 = arith.constant 0 : index
    %c0_20 = arith.constant 0 : index
    %22 = vector.load %arg1[%c0_18, %c0_19, %c0_20] : memref<1x16x256xf32, #tpu.memory_space<vmem>>, vector<1x16x256xf32>
    %23 = vector.shape_cast %21 : vector<1x16xf32> to vector<1x16x1xf32>
    %24 = vector.broadcast %23 : vector<1x16x1xf32> to vector<1x16x256xf32>
    %25 = arith.mulf %22, %24 : vector<1x16x256xf32>
    %c0_21 = arith.constant 0 : index
    %c0_22 = arith.constant 0 : index
    %c0_23 = arith.constant 0 : index
    %26 = vector.load %arg6[%c0_21, %c0_22, %c0_23] : memref<1x16x256xf32, #tpu.memory_space<vmem>>, vector<1x16x256xf32>
    tpu.vector_store %arg6[%c0_21, %c0_22, %c0_23], %25 {strides = array<i32>} : memref<1x16x256xf32, #tpu.memory_space<vmem>>, vector<1x16x256xf32>,
    return
  }
  func.func @transform_0(%arg0: i32) -> (i32, i32, i32) {
    %c0_i32 = arith.constant 0 : i32
    %c0_i32_0 = arith.constant 0 : i32
    %c0_i32_1 = arith.constant 0 : i32
    return %arg0, %c0_i32, %c0_i32_0 : i32, i32, i32
  }
  func.func @transform_1(%arg0: i32) -> (i32, i32) {
    %c0_i32 = arith.constant 0 : i32
    %c0_i32_0 = arith.constant 0 : i32
    %c0_i32_1 = arith.constant 0 : i32
    return %c0_i32, %c0_i32_0 : i32, i32
  }
  func.func @transform_2(%arg0: i32) -> (i32, i32) {
    %c0_i32 = arith.constant 0 : i32
    %c0_i32_0 = arith.constant 0 : i32
    %c0_i32_1 = arith.constant 0 : i32
    return %c0_i32, %c0_i32_0 : i32, i32
  }
  func.func @transform_3(%arg0: i32) -> (i32, i32) {
    %c0_i32 = arith.constant 0 : i32
    %c0_i32_0 = arith.constant 0 : i32
    %c0_i32_1 = arith.constant 0 : i32
    return %c0_i32, %c0_i32_0 : i32, i32
  }
  func.func @transform_4(%arg0: i32) -> (i32, i32) {
    %c0_i32 = arith.constant 0 : i32
    %c0_i32_0 = arith.constant 0 : i32
    %c0_i32_1 = arith.constant 0 : i32
    return %c0_i32, %c0_i32_0 : i32, i32
  }
  func.func @transform_5(%arg0: i32) -> (i32, i32, i32) {
    %c0_i32 = arith.constant 0 : i32
    %c0_i32_0 = arith.constant 0 : i32
    %c0_i32_1 = arith.constant 0 : i32
    return %arg0, %c0_i32, %c0_i32_0 : i32, i32, i32
  }
}

</mosaic_0001>

<llo_original>
// kernel: tpu_custom_call.1
$region0: #{tpu_custom_call.1}
  #allocation0 [shape = 'u32[]', space=smem, size = 0x4, offset = 0x4, fixed_abs, tag = 'smem constant byte address 0x4 - core index']
  #allocation1 [shape = 'u32[72,128]{1,0:T(1,128)}', space=vmem, size = 0x9000, scoped, tag = 'internal scratch']
  %s0 = inlined_call_operand.hbm [shape: f32[2,16,256], index: 0, kind: input, shape index: {}]
  %s1 = inlined_call_operand.vmem [shape: f32[16,4], index: 1, kind: input, shape index: {}]
  %s2 = inlined_call_operand.vmem [shape: f32[1,4], index: 2, kind: input, shape index: {}]
  %s3 = inlined_call_operand.vmem [shape: f32[4,16], index: 3, kind: input, shape index: {}]
  %s4 = inlined_call_operand.vmem [shape: f32[1,16], index: 4, kind: input, shape index: {}]
  %s5 = inlined_call_operand.hbm [shape: f32[2,16,256], index: 5, kind: output, shape index: {}]
  %s6 = sld [smem:[#allocation0]]
  $region57: #{tpu_custom_call.1} parent=0
    _
  %s8 = ssub.s32 1, %s6
  %s9 = scalar_select 0, %s8, %s6
  $region1: #{tpu_custom_call.1} parent=0
    #allocation2 [shape = 'u8[32768]{0}', space=vmem, size = 0x8000, scoped, tag = 'input window, operand 0']
    #allocation3 [shape = 's32[2]{0}', space=sflag, size = 0x8, scoped, tag = 'scoped memory for tpu_custom_call.1']
    #allocation4 [shape = 's32[2]{0}', space=sflag, size = 0x8, scoped, tag = 'scoped memory for tpu_custom_call.1']
    #allocation5 [shape = 'u8[32768]{0}', space=vmem, size = 0x8000, scoped, tag = 'output window, operand 0']
    %10 = vsyncpa [#allocation3], 0
    %s11 = scalar_lea.sflag [#allocation3], 1
    %12 = vsyncpa %s11, 0
    %13 = vsyncpa [#allocation4], 0
    %s14 = scalar_lea.sflag [#allocation4], 1
    %15 = vsyncpa %s14, 0
    loop: start=0, step=1, limit=4
    $region2: #{tpu_custom_call.1} parent=1 // loop_pre_header
      _
    $region3: #{tpu_custom_call.1} parent=1 // loop_header
      %s17 = sphi 0, %s21
      %p18 = scmp.ge.s32.totalorder %s17, 4
      %s27 = sphi 0, %s29
      %s30 = sphi 0, %s27
      %s31 = sphi 0, %s30
      %s47 = sphi 0, %s31
      %s51 = sphi 0, %s51
      %s53 = sphi 0, %s51
      %s54 = sphi 0, %s53
      %s68 = sphi 0, %s54
      %s72 = sphi 0, %s72
      %s74 = sphi 0, %s72
      %s75 = sphi 0, %s74
      %s89 = sphi 0, %s75
      %s93 = sphi 0, %s93
      %s95 = sphi 0, %s93
      %s96 = sphi 0, %s95
      %s110 = sphi 0, %s96
      %s114 = sphi 0, %s114
      %s116 = sphi 0, %s114
      %s117 = sphi 0, %s116
      %s131 = sphi 0, %s117
      %s137 = sphi 0, %s139
      %s140 = sphi 0, %s137
      %s141 = sphi 0, %s140
      %s157 = sphi 0, %s141
    $region4: #{tpu_custom_call.1} parent=1 // loop_header_branch
      %20 = sbr.rel (%p18) target = $region8
    $region5: #{tpu_custom_call.1} parent=1 // loop_body
      %s22 = ssub.s32 %s17, 1
      %s23 = ssub.s32 %s17, 2
      %s24 = sadd.s32 %s17, 1
      %s25 = ssub.s32 %s17, %s24
      %p26 = scmp.eq.s32.totalorder %s25, 0
      %s28 = sadd.s32 %s27, 1
      %s29 = scalar_select %p26, %s27, %s28
      %p32 = pneg %p26
      %p33 = scmp.eq.s32.totalorder %s17, 1
      %p34 = por %p32, %p33
      %p35 = scmp.ne.s32.totalorder %s27, %s30
      %p36 = scmp.eq.s32.totalorder %s17, 0
      %p37 = por %p35, %p36
      %p38 = scmp.ne.s32.totalorder %s27, %s30
      %p39 = scmp.eq.s32.totalorder %s22, 1
      %p40 = por %p38, %p39
      %p41 = scmp.ne.s32.totalorder %s30, %s31
      %p42 = scmp.eq.s32.totalorder %s22, 0
      %p43 = por %p41, %p42
      %p44 = scmp.ne.s32.totalorder %s30, %s31
      %p45 = scmp.eq.s32.totalorder %s23, 1
      %p46 = por %p44, %p45
      %p48 = scmp.ne.s32.totalorder %s31, %s47
      %p49 = scmp.eq.s32.totalorder %s23, 0
      %p50 = por %p48, %p49
      %s52 = sadd.s32 %s51, 1
      %p55 = scmp.eq.s32.totalorder %s17, 1
      %p56 = scmp.ne.s32.totalorder %s51, %s53
      %p57 = scmp.eq.s32.totalorder %s17, 0
      %p58 = por %p56, %p57
      %p59 = scmp.ne.s32.totalorder %s51, %s53
      %p60 = scmp.eq.s32.totalorder %s22, 1
      %p61 = por %p59, %p60
      %p62 = scmp.ne.s32.totalorder %s53, %s54
      %p63 = scmp.eq.s32.totalorder %s22, 0
      %p64 = por %p62, %p63
      %p65 = scmp.ne.s32.totalorder %s53, %s54
      %p66 = scmp.eq.s32.totalorder %s23, 1
      %p67 = por %p65, %p66
      %p69 = scmp.ne.s32.totalorder %s54, %s68
      %p70 = scmp.eq.s32.totalorder %s23, 0
      %p71 = por %p69, %p70
      %s73 = sadd.s32 %s72, 1
      %p76 = scmp.eq.s32.totalorder %s17, 1
      %p77 = scmp.ne.s32.totalorder %s72, %s74
      %p78 = scmp.eq.s32.totalorder %s17, 0
      %p79 = por %p77, %p78
      %p80 = scmp.ne.s32.totalorder %s72, %s74
      %p81 = scmp.eq.s32.totalorder %s22, 1
      %p82 = por %p80, %p81
      %p83 = scmp.ne.s32.totalorder %s74, %s75
      %p84 = scmp.eq.s32.totalorder %s22, 0
      %p85 = por %p83, %p84
      %p86 = scmp.ne.s32.totalorder %s74, %s75
      %p87 = scmp.eq.s32.totalorder %s23, 1
      %p88 = por %p86, %p87
      %p90 = scmp.ne.s32.totalorder %s75, %s89
      %p91 = scmp.eq.s32.totalorder %s23, 0
      %p92 = por %p90, %p91
      %s94 = sadd.s32 %s93, 1
      %p97 = scmp.eq.s32.totalorder %s17, 1
      %p98 = scmp.ne.s32.totalorder %s93, %s95
      %p99 = scmp.eq.s32.totalorder %s17, 0
      %p100 = por %p98, %p99
      %p101 = scmp.ne.s32.totalorder %s93, %s95
      %p102 = scmp.eq.s32.totalorder %s22, 1
      %p103 = por %p101, %p102
      %p104 = scmp.ne.s32.totalorder %s95, %s96
      %p105 = scmp.eq.s32.totalorder %s22, 0
      %p106 = por %p104, %p105
      %p107 = scmp.ne.s32.totalorder %s95, %s96
      %p108 = scmp.eq.s32.totalorder %s23, 1
      %p109 = por %p107, %p108
      %p111 = scmp.ne.s32.totalorder %s96, %s110
      %p112 = scmp.eq.s32.totalorder %s23, 0
      %p113 = por %p111, %p112
      %s115 = sadd.s32 %s114, 1
      %p118 = scmp.eq.s32.totalorder %s17, 1
      %p119 = scmp.ne.s32.totalorder %s114, %s116
      %p120 = scmp.eq.s32.totalorder %s17, 0
      %p121 = por %p119, %p120
      %p122 = scmp.ne.s32.totalorder %s114, %s116
      %p123 = scmp.eq.s32.totalorder %s22, 1
      %p124 = por %p122, %p123
      %p125 = scmp.ne.s32.totalorder %s116, %s117
      %p126 = scmp.eq.s32.totalorder %s22, 0
      %p127 = por %p125, %p126
      %p128 = scmp.ne.s32.totalorder %s116, %s117
      %p129 = scmp.eq.s32.totalorder %s23, 1
      %p130 = por %p128, %p129
      %p132 = scmp.ne.s32.totalorder %s117, %s131
      %p133 = scmp.eq.s32.totalorder %s23, 0
      %p134 = por %p132, %p133
      %s135 = ssub.s32 %s17, %s24
      %p136 = scmp.eq.s32.totalorder %s135, 0
      %s138 = sadd.s32 %s137, 1
      %s139 = scalar_select %p136, %s137, %s138
      %p142 = pneg %p136
      %p143 = scmp.eq.s32.totalorder %s17, 1
      %p144 = por %p142, %p143
      %p145 = scmp.ne.s32.totalorder %s137, %s140
      %p146 = scmp.eq.s32.totalorder %s17, 0
      %p147 = por %p145, %p146
      %p148 = scmp.ne.s32.totalorder %s137, %s140
      %p149 = scmp.eq.s32.totalorder %s22, 1
      %p150 = por %p148, %p149
      %p151 = scmp.ne.s32.totalorder %s140, %s141
      %p152 = scmp.eq.s32.totalorder %s22, 0
      %p153 = por %p151, %p152
      %p154 = scmp.ne.s32.totalorder %s140, %s141
      %p155 = scmp.eq.s32.totalorder %s23, 1
      %p156 = por %p154, %p155
      %p158 = scmp.ne.s32.totalorder %s141, %s157
      %p159 = scmp.eq.s32.totalorder %s23, 0
      %p160 = por %p158, %p159
      %p161 = scmp.le.s32.totalorder 1, %s17
      %p162 = scmp.lt.s32.totalorder %s17, 3
      %p163 = pnand %p161, %p162
      %p164 = pneg %p163
      // Predicated region
      $region9: #{tpu_custom_call.1} parent=5 // pred_check
        _
      $region10: #{tpu_custom_call.1} parent=5 // pred_check_branch
        %166 = sbr.rel (%p163) target = $region12
      $region11: #{tpu_custom_call.1} parent=5 // pred_region
        %s167 = ssub.s32 %s17, 1
        // Predicated region
        $region13: #{tpu_custom_call.1} parent=11 // pred_check
          %p168 = pneg %p64
        $region14: #{tpu_custom_call.1} parent=11 // pred_check_branch
          %170 = sbr.rel (%p168) target = $region16
        $region15: #{tpu_custom_call.1} parent=11 // pred_region
          _
        $region16: #{tpu_custom_call.1} parent=11 // pred_fallthru
          _
        // Predicated region
        $region17: #{tpu_custom_call.1} parent=11 // pred_check
          %p171 = pneg %p85
        $region18: #{tpu_custom_call.1} parent=11 // pred_check_branch
          %173 = sbr.rel (%p171) target = $region20
        $region19: #{tpu_custom_call.1} parent=11 // pred_region
          _
        $region20: #{tpu_custom_call.1} parent=11 // pred_fallthru
          _
        // Predicated region
        $region21: #{tpu_custom_call.1} parent=11 // pred_check
          %p174 = pneg %p106
        $region22: #{tpu_custom_call.1} parent=11 // pred_check_branch
          %176 = sbr.rel (%p174) target = $region24
        $region23: #{tpu_custom_call.1} parent=11 // pred_region
          _
        $region24: #{tpu_custom_call.1} parent=11 // pred_fallthru
          _
        // Predicated region
        $region25: #{tpu_custom_call.1} parent=11 // pred_check
          %p177 = pneg %p127
        $region26: #{tpu_custom_call.1} parent=11 // pred_check_branch
          %179 = sbr.rel (%p177) target = $region28
        $region27: #{tpu_custom_call.1} parent=11 // pred_region
          _
        $region28: #{tpu_custom_call.1} parent=11 // pred_fallthru
          _
      $region12: #{tpu_custom_call.1} parent=5 // pred_fallthru
        _
      %p180 = scmp.lt.s32.totalorder %s17, 2
      // Predicated region
      $region29: #{tpu_custom_call.1} parent=5 // pred_check
        %p181 = pneg %p180
      $region30: #{tpu_custom_call.1} parent=5 // pred_check_branch
        %183 = sbr.rel (%p181) target = $region32
      $region31: #{tpu_custom_call.1} parent=5 // pred_region
        // Predicated region
        $region33: #{tpu_custom_call.1} parent=31 // pred_check
          %p184 = pneg %p37
        $region34: #{tpu_custom_call.1} parent=31 // pred_check_branch
          %186 = sbr.rel (%p184) target = $region36
        $region35: #{tpu_custom_call.1} parent=31 // pred_region
          %s187 = sand.u32 %s27, 1
          %s188 = scalar_lea.sflag [#allocation3], %s187
          %s189 = sand.u32 %s27, 1
          %s190 = smul.addr %s189, 32
          %s191 = scalar_lea.vmem [#allocation2], %s190
          %193 = vsyncadd %s188, 0
          %s194 = smul.addr %s17, 4
          %s195 = smul.addr %s194, 8
          %s196 = scalar_lea.hbm %s0, %s195
          %s197 = sshll.u32 %s196, 4
          %s198 = int_to_ptr.hbm [resolvable:$true] %s197
          %s199 = sshll.u32 %s191, 4
          %s200 = int_to_ptr.vmem [resolvable:$true] %s199
          %205 = dma.hbm_to_vmem [thread:$0]  %s198, 512, %s200, %s188, 256, 256, 16
        $region36: #{tpu_custom_call.1} parent=31 // pred_fallthru
          _
      $region32: #{tpu_custom_call.1} parent=5 // pred_fallthru
        _
      %p206 = scmp.le.s32.totalorder 1, %s17
      %p207 = scmp.lt.s32.totalorder %s17, 3
      %p208 = pnand %p206, %p207
      %p209 = pneg %p208
      // Predicated region
      $region37: #{tpu_custom_call.1} parent=5 // pred_check
        _
      $region38: #{tpu_custom_call.1} parent=5 // pred_check_branch
        %211 = sbr.rel (%p208) target = $region40
      $region39: #{tpu_custom_call.1} parent=5 // pred_region
        %s212 = ssub.s32 %s17, 1
        %s213 = sand.u32 %s30, 1
        %s214 = scalar_lea.sflag [#allocation3], %s213
        %s215 = sand.u32 %s30, 1
        %s216 = smul.addr %s215, 32
        %s217 = scalar_lea.vmem [#allocation2], %s216
        // Predicated region
        $region41: #{tpu_custom_call.1} parent=39 // pred_check
          %p218 = pneg %p43
        $region42: #{tpu_custom_call.1} parent=39 // pred_check_branch
          %220 = sbr.rel (%p218) target = $region44
        $region43: #{tpu_custom_call.1} parent=39 // pred_region
          %222 = dma.done %s214, 512
        $region44: #{tpu_custom_call.1} parent=39 // pred_fallthru
          _
        %s223 = sand.u32 %s30, 1
        %s224 = scalar_lea.sflag [#allocation3], %s223
        %s225 = sand.u32 %s30, 1
        %s226 = smul.addr %s225, 32
        %s227 = scalar_lea.vmem [#allocation2], %s226
        %p228 = pneg %p43
        %p229 = pneg %p40
        %p230 = pneg %p64
        %p231 = pneg %p61
        %p232 = pneg %p85
        %p233 = pneg %p82
        %p234 = pneg %p106
        %p235 = pneg %p103
        %p236 = pneg %p127
        %p237 = pneg %p124
        %p238 = pneg %p153
        %p239 = pneg %p150
        %s240 = sand.u32 %s140, 1
        %s241 = scalar_lea.sflag [#allocation4], %s240
        %s242 = sand.u32 %s140, 1
        %s243 = smul.addr %s242, 32
        %s244 = scalar_lea.vmem [#allocation5], %s243
        %v245 = vld [vmem:[%s217] sm:$0xff]
        %v246 = vld [vmem:[%s217 + $0x8] sm:$0xff]
        %v247 = vld [vmem:[%s217 + $0x10] sm:$0xff]
        %v248 = vld [vmem:[%s217 + $0x18] sm:$0xff]
        %v249 = vadd.f32 %v245, %v246
        %250 = vadd.xlane.f32.xlu0 %v249
        %v251 = vpop.xlane.xlu0 %250
        %v252 = vadd.f32 %v247, %v248
        %253 = vadd.xlane.f32.xlu0 %v252
        %v254 = vpop.xlane.xlu0 %253
        %v255 = vmul.f32 %v251, 0.00390625
        %v256 = vmul.f32 %v254, 0.00390625
        %v257 = vld [vmem:[%s1] sm:$0xff]
        %v258 = vld [vmem:[%s1 + $0x8] sm:$0xff]
        %v259 = vld [vmem:[%s2] sm:$0x1]
        %v262 = vlaneseq
        %v263 = vand.u32 %v262, 127
        %v264 = vperm.slane %v255, %v263
        %v265 = vadd.s32 %v263, 4294967288
        %v266 = vperm.slane %v256, %v265
        %vm267 = vcmask 130112
        %v268 = vsel %vm267, %v266, %v264
        %vm269 = vcmask 130048
        %v270 = vsel %vm269, %v268, 0
        %272 = vmatpush.msra.mxu0 0.0
        %273 = vmatpush.msra.mxu0 0.0
        %274 = vmatpush.msra.mxu0 0.0
        %275 = vmatpush.msra.mxu0 0.0
        %276 = vmatpush.msra.mxu0 0.0
        %277 = vmatpush.msra.mxu0 0.0
        %278 = vmatpush.msra.mxu0 0.0
        %279 = vmatpush.msra.mxu0 0.0
        %280 = vmatpush.msra.mxu0 0.0
        %281 = vmatpush.msra.mxu0 0.0
        %282 = vmatpush.msra.mxu0 0.0
        %283 = vmatpush.msra.mxu0 0.0
        %284 = vmatpush.msra.mxu0 0.0
        %285 = vmatpush.msra.mxu0 0.0
        %286 = vmatpush.msra.mxu0 %v258
        %287 = vmatpush.msra.mxu0 %v257
        %288 = vmatmul.f32.gmra.mxu0 %v270
        %v289 = vpop.f32.mrf.mxu0
        %v290 = vadd.f32 %v259, %v289
        %291 = vdwg.mxu0
        %v292 = vmax.f32 %v290, 0.0
        %v293 = vld [vmem:[%s3] sm:$0xf]
        %v294 = vld [vmem:[%s4] sm:$0x1]
        %vm295 = vcmask 31744
        %v297 = vsel %vm295, %v292, 0
        %vm299 = vcmask 1043456
        %v301 = vsel %vm299, %v293, 0
        %303 = vmatpush.msra.mxu0 0.0
        %304 = vmatpush.msra.mxu0 0.0
        %305 = vmatpush.msra.mxu0 0.0
        %306 = vmatpush.msra.mxu0 0.0
        %307 = vmatpush.msra.mxu0 0.0
        %308 = vmatpush.msra.mxu0 0.0
        %309 = vmatpush.msra.mxu0 0.0
        %310 = vmatpush.msra.mxu0 0.0
        %311 = vmatpush.msra.mxu0 0.0
        %312 = vmatpush.msra.mxu0 0.0
        %313 = vmatpush.msra.mxu0 0.0
        %314 = vmatpush.msra.mxu0 0.0
        %315 = vmatpush.msra.mxu0 0.0
        %316 = vmatpush.msra.mxu0 0.0
        %317 = vmatpush.msra.mxu0 0.0
        %318 = vmatpush.msra.mxu0 %v301
        %319 = vmatmul.f32.gmra.mxu0 %v297
        %v320 = vpop.f32.mrf.mxu0
        %v321 = vadd.f32 %v294, %v320
        %322 = vdwg.mxu0
        %v323 = vadd.f32 %v321, 3.0
        %v324 = vmax.f32 %v323, 0.0
        %v325 = vmin.f32 %v324, 6.0
        %v326 = vmul.f32 %v325, 0.16666667
        %v327 = vperm.slane %v326, 0
        %v328 = vlaneseq
        %v329 = vshrl.u32 %v328, 7
        %331 = vset.pattern.permute.xlu0 %v329
        %332 = vperm.xlu0 %331, %v327
        %v333 = vpop.permute.xlu0 %332
        %v334 = vlaneseq
        %v335 = vshrl.u32 %v334, 7
        %v336 = vadd.s32 %v335, 8
        %337 = vset.pattern.permute.xlu0 %v336
        %338 = vperm.xlu0 %337, %v327
        %v339 = vpop.permute.xlu0 %338
        %v340 = vmul.f32 %v245, %v333
        %v341 = vmul.f32 %v246, %v333
        %v342 = vmul.f32 %v247, %v339
        %v343 = vmul.f32 %v248, %v339
        %344 = vst [vmem:[%s244] sm:$0xff] %v340
        %345 = vst [vmem:[%s244 + $0x8] sm:$0xff] %v341
        %346 = vst [vmem:[%s244 + $0x10] sm:$0xff] %v342
        %347 = vst [vmem:[%s244 + $0x18] sm:$0xff] %v343
        %s348 = sand.u32 %s140, 1
        %s349 = scalar_lea.sflag [#allocation4], %s348
        %s350 = sand.u32 %s140, 1
        %s351 = smul.addr %s350, 32
        %s352 = scalar_lea.vmem [#allocation5], %s351
        // Predicated region
        $region45: #{tpu_custom_call.1} parent=39 // pred_check
          %p353 = pneg %p150
        $region46: #{tpu_custom_call.1} parent=39 // pred_check_branch
          %355 = sbr.rel (%p353) target = $region48
        $region47: #{tpu_custom_call.1} parent=39 // pred_region
          %357 = vsyncadd %s349, 0
          %s358 = smul.addr %s22, 4
          %s359 = smul.addr %s358, 8
          %s360 = scalar_lea.hbm %s5, %s359
          %s361 = sshll.u32 %s352, 4
          %s362 = int_to_ptr.vmem [resolvable:$true] %s361
          %s363 = sshll.u32 %s360, 4
          %s364 = int_to_ptr.hbm [resolvable:$true] %s363
          %369 = dma.vmem_to_hbm [thread:$0]  %s362, 512, %s364, %s349, 256, 256, 16
        $region48: #{tpu_custom_call.1} parent=39 // pred_fallthru
          _
      $region40: #{tpu_custom_call.1} parent=5 // pred_fallthru
        _
      %p370 = scmp.le.s32.totalorder 2, %s17
      // Predicated region
      $region49: #{tpu_custom_call.1} parent=5 // pred_check
        %p371 = pneg %p370
      $region50: #{tpu_custom_call.1} parent=5 // pred_check_branch
        %373 = sbr.rel (%p371) target = $region52
      $region51: #{tpu_custom_call.1} parent=5 // pred_region
        %s374 = ssub.s32 %s17, 2
        // Predicated region
        $region53: #{tpu_custom_call.1} parent=51 // pred_check
          %p375 = pneg %p156
        $region54: #{tpu_custom_call.1} parent=51 // pred_check_branch
          %377 = sbr.rel (%p375) target = $region56
        $region55: #{tpu_custom_call.1} parent=51 // pred_region
          %s378 = sand.u32 %s141, 1
          %s379 = scalar_lea.sflag [#allocation4], %s378
          %s380 = sand.u32 %s141, 1
          %s381 = smul.addr %s380, 32
          %s382 = scalar_lea.vmem [#allocation5], %s381
          %384 = dma.done %s379, 512
        $region56: #{tpu_custom_call.1} parent=51 // pred_fallthru
          _
      $region52: #{tpu_custom_call.1} parent=5 // pred_fallthru
        _
    $region6: #{tpu_custom_call.1} parent=1 // loop_footer
      %s21 = sadd.s32 1, %s17
    $region7: #{tpu_custom_call.1} parent=1 // loop_footer_branch
      %16 = sbr.rel target = $region3
    $region8: #{tpu_custom_call.1} parent=1 // loop_exit
      _
    %385 = vsyncpa [#allocation3], 1
    %s386 = scalar_lea.sflag [#allocation3], 1
    %387 = vsyncpa %s386, 1
    %388 = vsyncpa [#allocation4], 1
    %s389 = scalar_lea.sflag [#allocation4], 1
    %390 = vsyncpa %s389, 1

</llo_original>
